<compile_context>
chip_gen: v6e
topology: v6e:2x2x1
jax: 0.10.0
libtpu: 0.0.40
codegen_flags: <defaults>
</compile_context>

<pallas_src>
import functools
import math

import jax
import jax.numpy as jnp
from jax.experimental import pallas as pl
from jax.experimental.pallas import tpu as pltpu

BN_EPS = 1e-5


def _resblock_up_kernel(x_ref, w_ref, b_ref, mr_ref, md_ref, out_ref,
                        xcat_ref, *, W):
    """Fused ResBlockUpsample for a lane-packed tile of tb images.

    x_ref:    (Cin, tb*H*W)       inputs, images packed along the lane axis
    w_ref:    (4*Cout, 4*Cin)     folded weights (4 output parities stacked on M)
    b_ref:    (4*Cout, 1)         folded bias (both branches)
    mr_ref:   (1, tb*H*W)         1.0 where a right neighbour exists (col != W-1)
    md_ref:   (1, tb*H*W)         1.0 where a down  neighbour exists (row != H-1)
    out_ref:  (4*Cout, tb*H*W)    4 output-parity planes, lane-packed
    xcat_ref: (4*Cin, tb*H*W)     VMEM scratch staging [x, x_r, x_d, x_dr]
    """
    cin, thw = x_ref.shape

    x0 = x_ref[...]                               # (Cin, thw)
    m_r = mr_ref[...]
    m_d = md_ref[...]
    m_dr = m_r * m_d

    # Neighbour views in the flattened layout.  Rolls are over the packed lane
    # axis; any wrap across row/image boundaries lands only on masked columns.
    xcat_ref[pl.ds(0, cin), :] = x0
    xcat_ref[pl.ds(cin, cin), :] = pltpu.roll(x0, thw - 1, 1) * m_r          # x[m, n+1]
    xcat_ref[pl.ds(2 * cin, cin), :] = pltpu.roll(x0, thw - W, 1) * m_d      # x[m+1, n]
    xcat_ref[pl.ds(3 * cin, cin), :] = pltpu.roll(x0, thw - W - 1, 1) * m_dr  # x[m+1, n+1]

    # One MXU launch for the whole tile: (4*Cout, 4*Cin) @ (4*Cin, tb*H*W).
    acc = jnp.dot(w_ref[...], xcat_ref[...],
                  preferred_element_type=jnp.float32)         # (4*Cout, thw) f32
    y = acc + b_ref[...].astype(jnp.float32)                  # single broadcast
    y = jnp.maximum(y, 0.2 * y)                                # LeakyReLU(0.2)
    out_ref[...] = y.astype(out_ref.dtype)


def _fold_params(params, bn, eps=BN_EPS):
    """Fold ConvT taps + 1x1 shortcut + (BN | conv bias) into one matrix.

    Returns:
      wc: (4*Cout, 4*Cin)  weights against [x, x_right, x_down, x_downright],
                           rows [p*Cout:(p+1)*Cout] = output parity p = 2*py+px
      bc: (4*Cout, 1)      combined bias
    """
    w_dc = params["w_deconv"]                      # (Cin, Cout, 3, 3)  PyTorch layout
    w_sc = params["w_sc"][:, :, 0, 0]              # (Cout, Cin)
    cout = w_dc.shape[1]

    if bn:
        s1 = params["bn1_gamma"] / jnp.sqrt(params["bn1_var"] + eps)
        b1 = params["bn1_beta"] - params["bn1_mean"] * s1
        s2 = params["bn2_gamma"] / jnp.sqrt(params["bn2_var"] + eps)
        b2 = params["bn2_beta"] - params["bn2_mean"] * s2
    else:
        s1 = jnp.ones((cout,), jnp.float32)
        b1 = params["b_deconv"]
        s2 = jnp.ones((cout,), jnp.float32)
        b2 = params["b_sc"]

    t = jnp.transpose(w_dc, (1, 0, 2, 3))          # (Cout, Cin, ky, kx)
    z = jnp.zeros_like(t[:, :, 0, 0])              # (Cout, Cin)
    sc = s2[:, None] * w_sc                        # shortcut folds onto the x0 tap

    def parity(t0, tr, td, tdr):
        return jnp.concatenate(
            [s1[:, None] * t0 + sc, s1[:, None] * tr,
             s1[:, None] * td, s1[:, None] * tdr], axis=1)     # (Cout, 4*Cin)

    # Taps feeding output pixel (2m+py, 2n+px) for stride-2 / pad-1 ConvTranspose:
    wc = jnp.concatenate([
        parity(t[:, :, 1, 1], z,             z,             z),              # (0,0)
        parity(t[:, :, 1, 2], t[:, :, 1, 0], z,             z),              # (0,1)
        parity(t[:, :, 2, 1], z,             t[:, :, 0, 1], z),              # (1,0)
        parity(t[:, :, 2, 2], t[:, :, 2, 0], t[:, :, 0, 2], t[:, :, 0, 0]),  # (1,1)
    ], axis=0)                                                   # (4*Cout, 4*Cin)
    bc = jnp.tile(b1 + b2, 4)[:, None]                           # (4*Cout, 1)
    return wc.astype(jnp.float32), bc.astype(jnp.float32)


def resblock_upsample_forward(x, params, bn, *, vmem_budget_bytes=20 << 20):
    """ResBlockUpsample forward: x (N, Cin, H, W) -> (N, Cout, 2H, 2W)."""
    N, cin, H, W = x.shape
    assert H >= 2 and W >= 2, "spatial dims must be >= 2"
    hw = H * W

    wc, bc = _fold_params(params, bn)
    cout4 = wc.shape[0]
    cout = cout4 // 4
    wc = wc.astype(x.dtype)                        # MXU operand dtype (bf16 ok)

    # --- batch tile from a VMEM budget (v7x: 64 MiB physical, 32 MiB scoped) ---
    in_b = x.dtype.itemsize
    out_b = x.dtype.itemsize
    per_img = (2 * cin * hw * in_b                 # streamed input, double-buffered
               + 2 * cout4 * hw * out_b            # streamed output, double-buffered
               + 4 * cin * hw * in_b               # xcat VMEM scratch
               + 2 * cout4 * hw * 4)               # f32 acc + epilogue temporaries
    tb = max(1, min(N, vmem_budget_bytes // per_img))
    if N >= 2:
        tb = min(tb, -(-N // 2))                   # >= 2 grid steps -> both v7x TCs busy
    g = 128 // math.gcd(hw, 128)                   # lane dim of blocks must be %128
    tb = max(g, (tb // g) * g)
    n_pad = -(-N // tb) * tb                       # pad instead of degrading tb

    # --- pack the batch along lanes: (Cin, n_pad*hw) ---
    x_flat = x.reshape(N, cin, hw)
    if n_pad != N:
        x_flat = jnp.pad(x_flat, ((0, n_pad - N), (0, 0), (0, 0)))
    x_packed = jnp.transpose(x_flat, (1, 0, 2)).reshape(cin, n_pad * hw)

    thw = tb * hw
    # Edge masks (1 where the rolled neighbour is in-bounds), kernel-resident.
    idx = jnp.arange(thw, dtype=jnp.int32) % hw
    m_right = (idx % W != W - 1).astype(x.dtype)[None, :]        # (1, thw)
    m_down = (idx // W != H - 1).astype(x.dtype)[None, :]        # (1, thw)

    kernel = functools.partial(_resblock_up_kernel, W=W)
    planes = pl.pallas_call(
        kernel,
        out_shape=jax.ShapeDtypeStruct((cout4, n_pad * hw), x.dtype),
        grid=(n_pad // tb,),
        in_specs=[
            pl.BlockSpec((cin, thw), lambda i: (0, i)),          # streamed input
            pl.BlockSpec(wc.shape, lambda i: (0, 0)),            # resident weights
            pl.BlockSpec(bc.shape, lambda i: (0, 0)),            # resident bias
            pl.BlockSpec(m_right.shape, lambda i: (0, 0)),       # resident mask
            pl.BlockSpec(m_down.shape, lambda i: (0, 0)),        # resident mask
        ],
        out_specs=pl.BlockSpec((cout4, thw), lambda i: (0, i)),
        scratch_shapes=[pltpu.VMEM((4 * cin, thw), x.dtype)],
        compiler_params=pltpu.CompilerParams(
            dimension_semantics=("parallel",),                   # batch axis -> 2 TCs on v7x
            vmem_limit_bytes=32 << 20),
    )(x_packed, wc, bc, m_right, m_down)

    # 2x2 pixel-shuffle of the parity planes: (4*Cout, n_pad*hw) -> (N, Cout, 2H, 2W).
    out = planes.reshape(2, 2, cout, n_pad, H, W)[:, :, :, :N]
    out = out.transpose(3, 2, 4, 0, 5, 1)          # (N, Cout, H, py, W, px)
    return out.reshape(N, cout, 2 * H, 2 * W)


def init_params(key, cin, cout, bn):
    """Deterministic params mirroring the PyTorch module's tensor shapes."""
    ks = jax.random.split(key, 12)
    p = {
        "w_deconv": 0.2 * jax.random.normal(ks[0], (cin, cout, 3, 3), jnp.float32),
        "w_sc": 0.3 * jax.random.normal(ks[1], (cout, cin, 1, 1), jnp.float32),
    }
    if bn:
        p.update({
            "bn1_gamma": 1.0 + 0.1 * jax.random.normal(ks[2], (cout,), jnp.float32),
            "bn1_beta": 0.1 * jax.random.normal(ks[3], (cout,), jnp.float32),
            "bn1_mean": 0.1 * jax.random.normal(ks[4], (cout,), jnp.float32),
            "bn1_var": jax.random.uniform(ks[5], (cout,), jnp.float32, 0.5, 1.5),
            "bn2_gamma": 1.0 + 0.1 * jax.random.normal(ks[6], (cout,), jnp.float32),
            "bn2_beta": 0.1 * jax.random.normal(ks[7], (cout,), jnp.float32),
            "bn2_mean": 0.1 * jax.random.normal(ks[8], (cout,), jnp.float32),
            "bn2_var": jax.random.uniform(ks[9], (cout,), jnp.float32, 0.5, 1.5),
        })
    else:
        p.update({
            "b_deconv": 0.1 * jax.random.normal(ks[10], (cout,), jnp.float32),
            "b_sc": 0.1 * jax.random.normal(ks[11], (cout,), jnp.float32),
        })
    return p


def reference_forward(x, params, bn, eps=BN_EPS):
    """Pure-JAX reference with PyTorch ResBlockUpsample semantics."""
    w_dc = params["w_deconv"]                      # (Cin, Cout, 3, 3)
    # ConvTranspose2d(k=3, s=2, p=1, out_pad=1) == conv of the 2x input-dilated
    # signal with the flipped kernel, padding (lo=1, hi=2) per spatial dim.
    w_conv = jnp.transpose(jnp.flip(w_dc, axis=(2, 3)), (1, 0, 2, 3))
    out = jax.lax.conv_general_dilated(
        x, w_conv, window_strides=(1, 1), padding=((1, 2), (1, 2)),
        lhs_dilation=(2, 2), dimension_numbers=("NCHW", "OIHW", "NCHW"))

    short = jnp.einsum("oi,nihw->nohw", params["w_sc"][:, :, 0, 0], x)
    short = jnp.repeat(jnp.repeat(short, 2, axis=2), 2, axis=3)   # nearest x2

    def bn_eval(v, g, b, m, var):
        return ((v - m[None, :, None, None])
                / jnp.sqrt(var + eps)[None, :, None, None]
                * g[None, :, None, None] + b[None, :, None, None])

    if bn:
        out = bn_eval(out, params["bn1_gamma"], params["bn1_beta"],
                      params["bn1_mean"], params["bn1_var"])
        short = bn_eval(short, params["bn2_gamma"], params["bn2_beta"],
                        params["bn2_mean"], params["bn2_var"])
    else:
        out = out + params["b_deconv"][None, :, None, None]
        short = short + params["b_sc"][None, :, None, None]

    y = out + short
    return jnp.maximum(y, 0.2 * y)                 # LeakyReLU(0.2)


if __name__ == "__main__":
    key = jax.random.PRNGKey(0)
    k_x, k_p1, k_p2 = jax.random.split(key, 3)

    N, Cin, Cout, H, W = 2, 8, 16, 16, 16
    x = jax.random.normal(k_x, (N, Cin, H, W), jnp.float32)

    for bn, k_p in ((True, k_p1), (False, k_p2)):
        params = init_params(k_p, Cin, Cout, bn)
        y = resblock_upsample_forward(x, params, bn)
        jax.block_until_ready(y)

        y_ref = reference_forward(x, params, bn)
        assert y.shape == (N, Cout, 2 * H, 2 * W), y.shape
        max_err = float(jnp.max(jnp.abs(y - y_ref)))
        assert jnp.allclose(y, y_ref, atol=1e-3, rtol=1e-3), (
            f"bn={bn} max_err={max_err}")

    print("KERNEL_OK")
</pallas_src>

<mosaic_0001>
module attributes {stable_mosaic.version = 11 : i64} {
  func.func @_resblock_up_kernel(%arg0: i32, %arg1: memref<8x256xf32, #tpu.memory_space<vmem>>, %arg2: memref<64x32xf32, #tpu.memory_space<vmem>>, %arg3: memref<64x1xf32, #tpu.memory_space<vmem>>, %arg4: memref<1x256xf32, #tpu.memory_space<vmem>>, %arg5: memref<1x256xf32, #tpu.memory_space<vmem>>, %arg6: memref<64x256xf32, #tpu.memory_space<vmem>>, %arg7: memref<32x256xf32, #tpu.memory_space<vmem>>) attributes {dimension_semantics = [#tpu.dimension_semantics<parallel>], iteration_bounds = array<i64: 2>, scalar_prefetch = 0 : i64, scratch_operands = 1 : i64, tpu.core_type = #tpu.core_type<tc>, window_params = [{transform_indices = @transform_0, window_bounds = array<i64: 8, 256>}, {pipeline_mode = #tpu.pipeline_mode<synchronous>, transform_indices = @transform_1, window_bounds = array<i64: 64, 32>}, {pipeline_mode = #tpu.pipeline_mode<synchronous>, transform_indices = @transform_2, window_bounds = array<i64: 64, 1>}, {pipeline_mode = #tpu.pipeline_mode<synchronous>, transform_indices = @transform_3, window_bounds = array<i64: 1, 256>}, {pipeline_mode = #tpu.pipeline_mode<synchronous>, transform_indices = @transform_4, window_bounds = array<i64: 1, 256>}, {transform_indices = @transform_5, window_bounds = array<i64: 64, 256>}]} {
    %c0 = arith.constant 0 : index
    %c0_0 = arith.constant 0 : index
    %0 = vector.load %arg1[%c0, %c0_0] : memref<8x256xf32, #tpu.memory_space<vmem>>, vector<8x256xf32>
    %c0_1 = arith.constant 0 : index
    %c0_2 = arith.constant 0 : index
    %1 = vector.load %arg4[%c0_1, %c0_2] : memref<1x256xf32, #tpu.memory_space<vmem>>, vector<1x256xf32>
    %c0_3 = arith.constant 0 : index
    %c0_4 = arith.constant 0 : index
    %2 = vector.load %arg5[%c0_3, %c0_4] : memref<1x256xf32, #tpu.memory_space<vmem>>, vector<1x256xf32>
    %3 = arith.mulf %1, %2 : vector<1x256xf32>
    %c0_5 = arith.constant 0 : index
    %c0_6 = arith.constant 0 : index
    %4 = vector.load %arg7[%c0_5, %c0_6] : memref<32x256xf32, #tpu.memory_space<vmem>>, vector<8x256xf32>
    tpu.vector_store %arg7[%c0_5, %c0_6], %0 {strides = array<i32>} : memref<32x256xf32, #tpu.memory_space<vmem>>, vector<8x256xf32>,
    %c255_i32 = arith.constant 255 : i32
    %5 = tpu.dynamic_rotate %0 by %c255_i32 dim 1 : vector<8x256xf32>, i32 -> vector<8x256xf32>
    %6 = vector.broadcast %1 : vector<1x256xf32> to vector<8x256xf32>
    %7 = arith.mulf %5, %6 : vector<8x256xf32>
    %c8 = arith.constant 8 : index
    %c0_7 = arith.constant 0 : index
    %8 = vector.load %arg7[%c8, %c0_7] : memref<32x256xf32, #tpu.memory_space<vmem>>, vector<8x256xf32>
    tpu.vector_store %arg7[%c8, %c0_7], %7 {strides = array<i32>} : memref<32x256xf32, #tpu.memory_space<vmem>>, vector<8x256xf32>,
    %c240_i32 = arith.constant 240 : i32
    %9 = tpu.dynamic_rotate %0 by %c240_i32 dim 1 : vector<8x256xf32>, i32 -> vector<8x256xf32>
    %10 = vector.broadcast %2 : vector<1x256xf32> to vector<8x256xf32>
    %11 = arith.mulf %9, %10 : vector<8x256xf32>
    %c16 = arith.constant 16 : index
    %c0_8 = arith.constant 0 : index
    %12 = vector.load %arg7[%c16, %c0_8] : memref<32x256xf32, #tpu.memory_space<vmem>>, vector<8x256xf32>
    tpu.vector_store %arg7[%c16, %c0_8], %11 {strides = array<i32>} : memref<32x256xf32, #tpu.memory_space<vmem>>, vector<8x256xf32>,
    %c239_i32 = arith.constant 239 : i32
    %13 = tpu.dynamic_rotate %0 by %c239_i32 dim 1 : vector<8x256xf32>, i32 -> vector<8x256xf32>
    %14 = vector.broadcast %3 : vector<1x256xf32> to vector<8x256xf32>
    %15 = arith.mulf %13, %14 : vector<8x256xf32>
    %c24 = arith.constant 24 : index
    %c0_9 = arith.constant 0 : index
    %16 = vector.load %arg7[%c24, %c0_9] : memref<32x256xf32, #tpu.memory_space<vmem>>, vector<8x256xf32>
    tpu.vector_store %arg7[%c24, %c0_9], %15 {strides = array<i32>} : memref<32x256xf32, #tpu.memory_space<vmem>>, vector<8x256xf32>,
    %c0_10 = arith.constant 0 : index
    %c0_11 = arith.constant 0 : index
    %17 = vector.load %arg2[%c0_10, %c0_11] : memref<64x32xf32, #tpu.memory_space<vmem>>, vector<64x32xf32>
    %c0_12 = arith.constant 0 : index
    %c0_13 = arith.constant 0 : index
    %18 = vector.load %arg7[%c0_12, %c0_13] : memref<32x256xf32, #tpu.memory_space<vmem>>, vector<32x256xf32>
    %cst = arith.constant dense<0.000000e+00> : vector<64x256xf32>
    %19 = tpu.matmul %17, %18, %cst {dimension_numbers = #tpu.dot_dimension_numbers<[1], [0], [0], [1], [0, 0, 1, 1], [], []>} : vector<64x32xf32>, vector<32x256xf32>, vector<64x256xf32> -> vector<64x256xf32>
    %c0_14 = arith.constant 0 : index
    %c0_15 = arith.constant 0 : index
    %20 = vector.load %arg3[%c0_14, %c0_15] : memref<64x1xf32, #tpu.memory_space<vmem>>, vector<64x1xf32>
    %21 = vector.broadcast %20 : vector<64x1xf32> to vector<64x256xf32>
    %22 = arith.addf %19, %21 : vector<64x256xf32>
    %cst_16 = arith.constant 2.000000e-01 : f32
    %23 = vector.broadcast %cst_16 : f32 to vector<64x256xf32>
    %24 = arith.mulf %23, %22 : vector<64x256xf32>
    %25 = arith.maximumf %22, %24 : vector<64x256xf32>
    %c0_17 = arith.constant 0 : index
    %c0_18 = arith.constant 0 : index
    %26 = vector.load %arg6[%c0_17, %c0_18] : memref<64x256xf32, #tpu.memory_space<vmem>>, vector<64x256xf32>
    tpu.vector_store %arg6[%c0_17, %c0_18], %25 {strides = array<i32>} : memref<64x256xf32, #tpu.memory_space<vmem>>, vector<64x256xf32>,
    return
  }
  func.func @transform_0(%arg0: i32) -> (i32, i32) {
    %c0_i32 = arith.constant 0 : i32
    %c0_i32_0 = arith.constant 0 : i32
    return %c0_i32, %arg0 : i32, i32
  }
  func.func @transform_1(%arg0: i32) -> (i32, i32) {
    %c0_i32 = arith.constant 0 : i32
    %c0_i32_0 = arith.constant 0 : i32
    %c0_i32_1 = arith.constant 0 : i32
    return %c0_i32, %c0_i32_0 : i32, i32
  }
  func.func @transform_2(%arg0: i32) -> (i32, i32) {
    %c0_i32 = arith.constant 0 : i32
    %c0_i32_0 = arith.constant 0 : i32
    %c0_i32_1 = arith.constant 0 : i32
    return %c0_i32, %c0_i32_0 : i32, i32
  }
  func.func @transform_3(%arg0: i32) -> (i32, i32) {
    %c0_i32 = arith.constant 0 : i32
    %c0_i32_0 = arith.constant 0 : i32
    %c0_i32_1 = arith.constant 0 : i32
    return %c0_i32, %c0_i32_0 : i32, i32
  }
  func.func @transform_4(%arg0: i32) -> (i32, i32) {
    %c0_i32 = arith.constant 0 : i32
    %c0_i32_0 = arith.constant 0 : i32
    %c0_i32_1 = arith.constant 0 : i32
    return %c0_i32, %c0_i32_0 : i32, i32
  }
  func.func @transform_5(%arg0: i32) -> (i32, i32) {
    %c0_i32 = arith.constant 0 : i32
    %c0_i32_0 = arith.constant 0 : i32
    return %c0_i32, %arg0 : i32, i32
  }
}

</mosaic_0001>

<llo_original>
// kernel: tpu_custom_call.1
$region0: #{tpu_custom_call.1}
  #allocation0 [shape = 'u32[]', space=smem, size = 0x4, offset = 0x4, fixed_abs, tag = 'smem constant byte address 0x4 - core index']
  #allocation1 [shape = 'u32[144,128]{1,0:T(1,128)}', space=vmem, size = 0x12000, scoped, tag = 'internal scratch']
  #allocation2 [shape = 'f32[32,256]{1,0:T(8,128)}', space=vmem, size = 0x8000, scoped, tag = 'scratch operand']
  %s0 = inlined_call_operand.vmem [shape: f32[8,512], index: 0, kind: input, shape index: {}]
  %s1 = inlined_call_operand.vmem [shape: f32[64,32], index: 1, kind: input, shape index: {}]
  %s2 = inlined_call_operand.vmem [shape: f32[64,1], index: 2, kind: input, shape index: {}]
  %s3 = inlined_call_operand.vmem [shape: f32[1,256], index: 3, kind: input, shape index: {}]
  %s4 = inlined_call_operand.vmem [shape: f32[1,256], index: 4, kind: input, shape index: {}]
  %s5 = inlined_call_operand.hbm [shape: f32[64,512], index: 5, kind: output, shape index: {}]
  %s6 = sld [smem:[#allocation0]]
  $region53: #{tpu_custom_call.1} parent=0
    _
  %s8 = ssub.s32 1, %s6
  %s9 = scalar_select 0, %s8, %s6
  $region1: #{tpu_custom_call.1} parent=0
    #allocation3 [shape = 'u8[131072]{0}', space=vmem, size = 0x20000, scoped, tag = 'output window, operand 0']
    #allocation4 [shape = 's32[2]{0}', space=sflag, size = 0x8, scoped, tag = 'scoped memory for tpu_custom_call.1']
    %10 = vsyncpa [#allocation4], 0
    %s11 = scalar_lea.sflag [#allocation4], 1
    %12 = vsyncpa %s11, 0
    loop: start=0, step=1, limit=4
    $region2: #{tpu_custom_call.1} parent=1 // loop_pre_header
      _
    $region3: #{tpu_custom_call.1} parent=1 // loop_header
      %s14 = sphi 0, %s18
      %p15 = scmp.ge.s32.totalorder %s14, 4
      %s24 = sphi 0, %s26
      %s27 = sphi 0, %s24
      %s28 = sphi 0, %s27
      %s44 = sphi 0, %s28
      %s48 = sphi 0, %s48
      %s50 = sphi 0, %s48
      %s51 = sphi 0, %s50
      %s65 = sphi 0, %s51
      %s69 = sphi 0, %s69
      %s71 = sphi 0, %s69
      %s72 = sphi 0, %s71
      %s86 = sphi 0, %s72
      %s90 = sphi 0, %s90
      %s92 = sphi 0, %s90
      %s93 = sphi 0, %s92
      %s107 = sphi 0, %s93
      %s111 = sphi 0, %s111
      %s113 = sphi 0, %s111
      %s114 = sphi 0, %s113
      %s128 = sphi 0, %s114
      %s134 = sphi 0, %s136
      %s137 = sphi 0, %s134
      %s138 = sphi 0, %s137
      %s154 = sphi 0, %s138
    $region4: #{tpu_custom_call.1} parent=1 // loop_header_branch
      %17 = sbr.rel (%p15) target = $region8
    $region5: #{tpu_custom_call.1} parent=1 // loop_body
      %s19 = ssub.s32 %s14, 1
      %s20 = ssub.s32 %s14, 2
      %s21 = sadd.s32 %s14, 1
      %s22 = ssub.s32 %s14, %s21
      %p23 = scmp.eq.s32.totalorder %s22, 0
      %s25 = sadd.s32 %s24, 1
      %s26 = scalar_select %p23, %s24, %s25
      %p29 = pneg %p23
      %p30 = scmp.eq.s32.totalorder %s14, 1
      %p31 = por %p29, %p30
      %p32 = scmp.ne.s32.totalorder %s24, %s27
      %p33 = scmp.eq.s32.totalorder %s14, 0
      %p34 = por %p32, %p33
      %p35 = scmp.ne.s32.totalorder %s24, %s27
      %p36 = scmp.eq.s32.totalorder %s19, 1
      %p37 = por %p35, %p36
      %p38 = scmp.ne.s32.totalorder %s27, %s28
      %p39 = scmp.eq.s32.totalorder %s19, 0
      %p40 = por %p38, %p39
      %p41 = scmp.ne.s32.totalorder %s27, %s28
      %p42 = scmp.eq.s32.totalorder %s20, 1
      %p43 = por %p41, %p42
      %p45 = scmp.ne.s32.totalorder %s28, %s44
      %p46 = scmp.eq.s32.totalorder %s20, 0
      %p47 = por %p45, %p46
      %s49 = sadd.s32 %s48, 1
      %p52 = scmp.eq.s32.totalorder %s14, 1
      %p53 = scmp.ne.s32.totalorder %s48, %s50
      %p54 = scmp.eq.s32.totalorder %s14, 0
      %p55 = por %p53, %p54
      %p56 = scmp.ne.s32.totalorder %s48, %s50
      %p57 = scmp.eq.s32.totalorder %s19, 1
      %p58 = por %p56, %p57
      %p59 = scmp.ne.s32.totalorder %s50, %s51
      %p60 = scmp.eq.s32.totalorder %s19, 0
      %p61 = por %p59, %p60
      %p62 = scmp.ne.s32.totalorder %s50, %s51
      %p63 = scmp.eq.s32.totalorder %s20, 1
      %p64 = por %p62, %p63
      %p66 = scmp.ne.s32.totalorder %s51, %s65
      %p67 = scmp.eq.s32.totalorder %s20, 0
      %p68 = por %p66, %p67
      %s70 = sadd.s32 %s69, 1
      %p73 = scmp.eq.s32.totalorder %s14, 1
      %p74 = scmp.ne.s32.totalorder %s69, %s71
      %p75 = scmp.eq.s32.totalorder %s14, 0
      %p76 = por %p74, %p75
      %p77 = scmp.ne.s32.totalorder %s69, %s71
      %p78 = scmp.eq.s32.totalorder %s19, 1
      %p79 = por %p77, %p78
      %p80 = scmp.ne.s32.totalorder %s71, %s72
      %p81 = scmp.eq.s32.totalorder %s19, 0
      %p82 = por %p80, %p81
      %p83 = scmp.ne.s32.totalorder %s71, %s72
      %p84 = scmp.eq.s32.totalorder %s20, 1
      %p85 = por %p83, %p84
      %p87 = scmp.ne.s32.totalorder %s72, %s86
      %p88 = scmp.eq.s32.totalorder %s20, 0
      %p89 = por %p87, %p88
      %s91 = sadd.s32 %s90, 1
      %p94 = scmp.eq.s32.totalorder %s14, 1
      %p95 = scmp.ne.s32.totalorder %s90, %s92
      %p96 = scmp.eq.s32.totalorder %s14, 0
      %p97 = por %p95, %p96
      %p98 = scmp.ne.s32.totalorder %s90, %s92
      %p99 = scmp.eq.s32.totalorder %s19, 1
      %p100 = por %p98, %p99
      %p101 = scmp.ne.s32.totalorder %s92, %s93
      %p102 = scmp.eq.s32.totalorder %s19, 0
      %p103 = por %p101, %p102
      %p104 = scmp.ne.s32.totalorder %s92, %s93
      %p105 = scmp.eq.s32.totalorder %s20, 1
      %p106 = por %p104, %p105
      %p108 = scmp.ne.s32.totalorder %s93, %s107
      %p109 = scmp.eq.s32.totalorder %s20, 0
      %p110 = por %p108, %p109
      %s112 = sadd.s32 %s111, 1
      %p115 = scmp.eq.s32.totalorder %s14, 1
      %p116 = scmp.ne.s32.totalorder %s111, %s113
      %p117 = scmp.eq.s32.totalorder %s14, 0
      %p118 = por %p116, %p117
      %p119 = scmp.ne.s32.totalorder %s111, %s113
      %p120 = scmp.eq.s32.totalorder %s19, 1
      %p121 = por %p119, %p120
      %p122 = scmp.ne.s32.totalorder %s113, %s114
      %p123 = scmp.eq.s32.totalorder %s19, 0
      %p124 = por %p122, %p123
      %p125 = scmp.ne.s32.totalorder %s113, %s114
      %p126 = scmp.eq.s32.totalorder %s20, 1
      %p127 = por %p125, %p126
      %p129 = scmp.ne.s32.totalorder %s114, %s128
      %p130 = scmp.eq.s32.totalorder %s20, 0
      %p131 = por %p129, %p130
      %s132 = ssub.s32 %s14, %s21
      %p133 = scmp.eq.s32.totalorder %s132, 0
      %s135 = sadd.s32 %s134, 1
      %s136 = scalar_select %p133, %s134, %s135
      %p139 = pneg %p133
      %p140 = scmp.eq.s32.totalorder %s14, 1
      %p141 = por %p139, %p140
      %p142 = scmp.ne.s32.totalorder %s134, %s137
      %p143 = scmp.eq.s32.totalorder %s14, 0
      %p144 = por %p142, %p143
      %p145 = scmp.ne.s32.totalorder %s134, %s137
      %p146 = scmp.eq.s32.totalorder %s19, 1
      %p147 = por %p145, %p146
      %p148 = scmp.ne.s32.totalorder %s137, %s138
      %p149 = scmp.eq.s32.totalorder %s19, 0
      %p150 = por %p148, %p149
      %p151 = scmp.ne.s32.totalorder %s137, %s138
      %p152 = scmp.eq.s32.totalorder %s20, 1
      %p153 = por %p151, %p152
      %p155 = scmp.ne.s32.totalorder %s138, %s154
      %p156 = scmp.eq.s32.totalorder %s20, 0
      %p157 = por %p155, %p156
      %p158 = scmp.le.s32.totalorder 1, %s14
      %p159 = scmp.lt.s32.totalorder %s14, 3
      %p160 = pnand %p158, %p159
      %p161 = pneg %p160
      // Predicated region
      $region9: #{tpu_custom_call.1} parent=5 // pred_check
        _
      $region10: #{tpu_custom_call.1} parent=5 // pred_check_branch
        %163 = sbr.rel (%p160) target = $region12
      $region11: #{tpu_custom_call.1} parent=5 // pred_region
        %s164 = ssub.s32 %s14, 1
        // Predicated region
        $region13: #{tpu_custom_call.1} parent=11 // pred_check
          %p165 = pneg %p61
        $region14: #{tpu_custom_call.1} parent=11 // pred_check_branch
          %167 = sbr.rel (%p165) target = $region16
        $region15: #{tpu_custom_call.1} parent=11 // pred_region
          _
        $region16: #{tpu_custom_call.1} parent=11 // pred_fallthru
          _
        // Predicated region
        $region17: #{tpu_custom_call.1} parent=11 // pred_check
          %p168 = pneg %p82
        $region18: #{tpu_custom_call.1} parent=11 // pred_check_branch
          %170 = sbr.rel (%p168) target = $region20
        $region19: #{tpu_custom_call.1} parent=11 // pred_region
          _
        $region20: #{tpu_custom_call.1} parent=11 // pred_fallthru
          _
        // Predicated region
        $region21: #{tpu_custom_call.1} parent=11 // pred_check
          %p171 = pneg %p103
        $region22: #{tpu_custom_call.1} parent=11 // pred_check_branch
          %173 = sbr.rel (%p171) target = $region24
        $region23: #{tpu_custom_call.1} parent=11 // pred_region
          _
        $region24: #{tpu_custom_call.1} parent=11 // pred_fallthru
          _
        // Predicated region
        $region25: #{tpu_custom_call.1} parent=11 // pred_check
          %p174 = pneg %p124
        $region26: #{tpu_custom_call.1} parent=11 // pred_check_branch
          %176 = sbr.rel (%p174) target = $region28
        $region27: #{tpu_custom_call.1} parent=11 // pred_region
          _
        $region28: #{tpu_custom_call.1} parent=11 // pred_fallthru
          _
      $region12: #{tpu_custom_call.1} parent=5 // pred_fallthru
        _
      %p177 = scmp.lt.s32.totalorder %s14, 2
      // Predicated region
      $region29: #{tpu_custom_call.1} parent=5 // pred_check
        %p178 = pneg %p177
      $region30: #{tpu_custom_call.1} parent=5 // pred_check_branch
        %180 = sbr.rel (%p178) target = $region32
      $region31: #{tpu_custom_call.1} parent=5 // pred_region
        // Predicated region
        $region33: #{tpu_custom_call.1} parent=31 // pred_check
          %p181 = pneg %p34
        $region34: #{tpu_custom_call.1} parent=31 // pred_check_branch
          %183 = sbr.rel (%p181) target = $region36
        $region35: #{tpu_custom_call.1} parent=31 // pred_region
          %s184 = smul.u32 2, %s14
          %p185 = scmp.lt.s32.totalorder %s184, 3
          %s186 = scalar_select %p185, %s184, 3
          %s187 = smul.addr %s186, 8
          %s188 = scalar_lea.vmem %s0, %s187
          %s189 = smul.u32 2, %s14
        $region36: #{tpu_custom_call.1} parent=31 // pred_fallthru
          _
      $region32: #{tpu_custom_call.1} parent=5 // pred_fallthru
        _
      %p190 = scmp.le.s32.totalorder 1, %s14
      %p191 = scmp.lt.s32.totalorder %s14, 3
      %p192 = pnand %p190, %p191
      %p193 = pneg %p192
      // Predicated region
      $region37: #{tpu_custom_call.1} parent=5 // pred_check
        _
      $region38: #{tpu_custom_call.1} parent=5 // pred_check_branch
        %195 = sbr.rel (%p192) target = $region40
      $region39: #{tpu_custom_call.1} parent=5 // pred_region
        %s196 = ssub.s32 %s14, 1
        %s197 = smul.u32 2, %s19
        %p198 = scmp.lt.s32.totalorder %s197, 3
        %s199 = scalar_select %p198, %s197, 3
        %s200 = smul.addr %s199, 8
        %s201 = scalar_lea.vmem %s0, %s200
        %p202 = pneg %p40
        %p203 = pneg %p37
        %p204 = pneg %p61
        %p205 = pneg %p58
        %p206 = pneg %p82
        %p207 = pneg %p79
        %p208 = pneg %p103
        %p209 = pneg %p100
        %p210 = pneg %p124
        %p211 = pneg %p121
        %p212 = pneg %p150
        %p213 = pneg %p147
        %s214 = sand.u32 %s137, 1
        %s215 = scalar_lea.sflag [#allocation4], %s214
        %s216 = sand.u32 %s137, 1
        %s217 = smul.addr %s216, 128
        %s218 = scalar_lea.vmem [#allocation3], %s217
        %s219 = smul.u32 2, %s19
        %p220 = scmp.lt.s32.totalorder %s219, 3
        %s221 = scalar_select %p220, %s219, 3
        %s222 = smul.addr %s221, 8
        %s223 = scalar_lea.vmem %s0, %s222
        %s224 = smul.u32 2, %s19
        %s225 = smul.u32 2, %s19
        %v226 = vld [vmem:[%s223] sm:$0xff]
        %v227 = vld [vmem:[%s223 + $0x8] sm:$0xff]
        %v228 = vld [vmem:[%s3] sm:$0x3]
        %v229 = vld [vmem:[%s4] sm:$0x3]
        %v230 = vmul.f32 %v228, %v229
        %231 = vst [vmem:[#allocation2] sm:$0xff] %v226
        %232 = vst [vmem:[#allocation2 + $0x8] sm:$0xff] %v227
        %233 = vrot.lane.b32.xlu0 %v226, 127
        %v234 = vpop.permute.xlu0 %233
        %235 = vrot.lane.b32.xlu0 %v227, 127
        %v236 = vpop.permute.xlu0 %235
        %v237 = vlaneseq
        %v238 = vand.u32 %v237, 127
        %vm239 = vcmp.lt.s32.totalorder %v238, 127
        %v240 = vsel %vm239, %v234, %v236
        %v241 = vsel %vm239, %v236, %v234
        %v243 = vlaneseq
        %v244 = vshrl.u32 %v243, 7
        %v245 = vsub.s32 0, %v244
        %v246 = vrot.slane %v228, %v245
        %v247 = vlaneseq
        %v248 = vshrl.u32 %v247, 7
        %v249 = vsub.s32 1, %v248
        %v250 = vrot.slane %v228, %v249
        %v253 = vmul.f32 %v240, %v246
        %v254 = vmul.f32 %v241, %v250
        %255 = vst [vmem:[#allocation2 + $0x10] sm:$0xff] %v253
        %256 = vst [vmem:[#allocation2 + $0x18] sm:$0xff] %v254
        %257 = vrot.lane.b32.xlu0 %v226, 112
        %v258 = vpop.permute.xlu0 %257
        %259 = vrot.lane.b32.xlu0 %v227, 112
        %v260 = vpop.permute.xlu0 %259
        %vm261 = vcmp.lt.s32.totalorder %v238, 112
        %v262 = vsel %vm261, %v258, %v260
        %v263 = vsel %vm261, %v260, %v258
        %v265 = vlaneseq
        %v266 = vshrl.u32 %v265, 7
        %v267 = vsub.s32 0, %v266
        %v268 = vrot.slane %v229, %v267
        %v269 = vlaneseq
        %v270 = vshrl.u32 %v269, 7
        %v271 = vsub.s32 1, %v270
        %v272 = vrot.slane %v229, %v271
        %v275 = vmul.f32 %v262, %v268
        %v276 = vmul.f32 %v263, %v272
        %277 = vst [vmem:[#allocation2 + $0x20] sm:$0xff] %v275
        %278 = vst [vmem:[#allocation2 + $0x28] sm:$0xff] %v276
        %279 = vrot.lane.b32.xlu0 %v226, 111
        %v280 = vpop.permute.xlu0 %279
        %281 = vrot.lane.b32.xlu0 %v227, 111
        %v282 = vpop.permute.xlu0 %281
        %vm283 = vcmp.lt.s32.totalorder %v238, 111
        %v284 = vsel %vm283, %v280, %v282
        %v285 = vsel %vm283, %v282, %v280
        %v287 = vlaneseq
        %v288 = vshrl.u32 %v287, 7
        %v289 = vsub.s32 0, %v288
        %v290 = vrot.slane %v230, %v289
        %v291 = vlaneseq
        %v292 = vshrl.u32 %v291, 7
        %v293 = vsub.s32 1, %v292
        %v294 = vrot.slane %v230, %v293
        %v297 = vmul.f32 %v284, %v290
        %v298 = vmul.f32 %v285, %v294
        %299 = vst [vmem:[#allocation2 + $0x30] sm:$0xff] %v297
        %300 = vst [vmem:[#allocation2 + $0x38] sm:$0xff] %v298
        %v301 = vld [vmem:[%s1] sm:$0xff]
        %v302 = vld [vmem:[%s1 + $0x8] sm:$0xff]
        %v303 = vld [vmem:[%s1 + $0x10] sm:$0xff]
        %v304 = vld [vmem:[%s1 + $0x18] sm:$0xff]
        %v305 = vld [vmem:[%s1 + $0x20] sm:$0xff]
        %v306 = vld [vmem:[%s1 + $0x28] sm:$0xff]
        %v307 = vld [vmem:[%s1 + $0x30] sm:$0xff]
        %v308 = vld [vmem:[%s1 + $0x38] sm:$0xff]
        %v309 = vld [vmem:[#allocation2] sm:$0xff]
        %v310 = vld [vmem:[#allocation2 + $0x8] sm:$0xff]
        %v311 = vld [vmem:[#allocation2 + $0x10] sm:$0xff]
        %v312 = vld [vmem:[#allocation2 + $0x18] sm:$0xff]
        %v313 = vld [vmem:[#allocation2 + $0x20] sm:$0xff]
        %v314 = vld [vmem:[#allocation2 + $0x28] sm:$0xff]
        %v315 = vld [vmem:[#allocation2 + $0x30] sm:$0xff]
        %v316 = vld [vmem:[#allocation2 + $0x38] sm:$0xff]
        %v317 = vld [vmem:[%s2] sm:$0xff]
        %v318 = vld [vmem:[%s2 + $0x8] sm:$0xff]
        %v319 = vld [vmem:[%s2 + $0x10] sm:$0xff]
        %v320 = vld [vmem:[%s2 + $0x18] sm:$0xff]
        %v321 = vld [vmem:[%s2 + $0x20] sm:$0xff]
        %v322 = vld [vmem:[%s2 + $0x28] sm:$0xff]
        %v323 = vld [vmem:[%s2 + $0x30] sm:$0xff]
        %v324 = vld [vmem:[%s2 + $0x38] sm:$0xff]
        %326 = vset.pattern.permute.xlu0 0
        %327 = vperm.xlu0 %326, %v317
        %v328 = vpop.permute.xlu0 %327
        %331 = vset.pattern.permute.xlu0 0
        %332 = vperm.xlu0 %331, %v318
        %v333 = vpop.permute.xlu0 %332
        %336 = vset.pattern.permute.xlu0 0
        %337 = vperm.xlu0 %336, %v319
        %v338 = vpop.permute.xlu0 %337
        %341 = vset.pattern.permute.xlu0 0
        %342 = vperm.xlu0 %341, %v320
        %v343 = vpop.permute.xlu0 %342
        %346 = vset.pattern.permute.xlu0 0
        %347 = vperm.xlu0 %346, %v321
        %v348 = vpop.permute.xlu0 %347
        %351 = vset.pattern.permute.xlu0 0
        %352 = vperm.xlu0 %351, %v322
        %v353 = vpop.permute.xlu0 %352
        %356 = vset.pattern.permute.xlu0 0
        %357 = vperm.xlu0 %356, %v323
        %v358 = vpop.permute.xlu0 %357
        %361 = vset.pattern.permute.xlu0 0
        %362 = vperm.xlu0 %361, %v324
        %v363 = vpop.permute.xlu0 %362
        %vm365 = vcmask 261120
        %v367 = vsel %vm365, %v301, 0
        %v370 = vsel %vm365, %v302, 0
        %v373 = vsel %vm365, %v303, 0
        %v376 = vsel %vm365, %v304, 0
        %v379 = vsel %vm365, %v305, 0
        %v382 = vsel %vm365, %v306, 0
        %v385 = vsel %vm365, %v307, 0
        %v388 = vsel %vm365, %v308, 0
        %390 = vmatprep.subr.mxu0 0.0
        %391 = vmatpush1.msra.mxu0 0.0
        %392 = vmatprep.subr.mxu0 0.0
        %393 = vmatpush1.msra.mxu0 0.0
        %394 = vmatprep.subr.mxu0 0.0
        %395 = vmatpush1.msra.mxu0 0.0
        %396 = vmatprep.subr.mxu0 0.0
        %397 = vmatpush1.msra.mxu0 0.0
        %398 = vmatprep.subr.mxu0 0.0
        %399 = vmatpush1.msra.mxu0 0.0
        %400 = vmatprep.subr.mxu0 0.0
        %401 = vmatpush1.msra.mxu0 0.0
        %402 = vmatprep.subr.mxu0 0.0
        %403 = vmatpush1.msra.mxu0 0.0
        %404 = vmatprep.subr.mxu0 0.0
        %405 = vmatpush1.msra.mxu0 0.0
        %406 = vmatprep.subr.mxu0 0.0
        %407 = vmatpush1.msra.mxu0 0.0
        %408 = vmatprep.subr.mxu0 0.0
        %409 = vmatpush1.msra.mxu0 0.0
        %410 = vmatprep.subr.mxu0 0.0
        %411 = vmatpush1.msra.mxu0 0.0
        %412 = vmatprep.subr.mxu0 0.0
        %413 = vmatpush1.msra.mxu0 0.0
        %414 = vmatprep.subr.mxu0 %v316
        %415 = vmatpush1.msra.mxu0 %v315
        %416 = vmatprep.subr.mxu0 %v314
        %417 = vmatpush1.msra.mxu0 %v313
        %418 = vmatprep.subr.mxu0 %v312
        %419 = vmatpush1.msra.mxu0 %v311
        %420 = vmatprep.subr.mxu0 %v310
        %421 = vmatpush1.msra.mxu0 %v309
        %422 = vmatprep.subr.mxu0 0.0
        %423 = vmatpush2.msra.mxu0 0.0
        %424 = vmatprep.subr.mxu0 0.0
        %425 = vmatpush2.msra.mxu0 0.0
        %426 = vmatprep.subr.mxu0 0.0
        %427 = vmatpush2.msra.mxu0 0.0
        %428 = vmatprep.subr.mxu0 0.0
        %429 = vmatpush2.msra.mxu0 0.0
        %430 = vmatprep.subr.mxu0 0.0
        %431 = vmatpush2.msra.mxu0 0.0
        %432 = vmatprep.subr.mxu0 0.0
        %433 = vmatpush2.msra.mxu0 0.0
        %434 = vmatprep.subr.mxu0 0.0
        %435 = vmatpush2.msra.mxu0 0.0
        %436 = vmatprep.subr.mxu0 0.0
        %437 = vmatpush2.msra.mxu0 0.0
        %438 = vmatprep.subr.mxu0 0.0
        %439 = vmatpush2.msra.mxu0 0.0
        %440 = vmatprep.subr.mxu0 0.0
        %441 = vmatpush2.msra.mxu0 0.0
        %442 = vmatprep.subr.mxu0 0.0
        %443 = vmatpush2.msra.mxu0 0.0
        %444 = vmatprep.subr.mxu0 0.0
        %445 = vmatpush2.msra.mxu0 0.0
        %446 = vmatprep.subr.mxu0 0.0
        %447 = vmatpush2.msra.mxu0 0.0
        %448 = vmatprep.subr.mxu0 0.0
        %449 = vmatpush2.msra.mxu0 0.0
        %450 = vmatprep.subr.mxu0 0.0
        %451 = vmatpush2.msra.mxu0 0.0
        %452 = vmatprep.subr.mxu0 0.0
        %453 = vmatpush2.msra.mxu0 0.0
        %454 = vmatprep.mubr.f32.mxu0 0.0
        %455 = vmatmul.mubr.f32.gmra.mxu0 %v367
        %v456 = vpop.f32.mrf.mxu0
        %v457 = vadd.f32 %v328, %v456
        %v458 = vpop.f32.mrf.mxu0
        %v459 = vadd.f32 %v328, %v458
        %460 = vmatprep.mubr.f32.mxu0 0.0
        %461 = vmatmul.mubr.f32.gmra.mxu0 %v370
        %v462 = vpop.f32.mrf.mxu0
        %v463 = vadd.f32 %v333, %v462
        %v464 = vpop.f32.mrf.mxu0
        %v465 = vadd.f32 %v333, %v464
        %466 = vmatprep.mubr.f32.mxu0 0.0
        %467 = vmatmul.mubr.f32.gmra.mxu0 %v373
        %v468 = vpop.f32.mrf.mxu0
        %v469 = vadd.f32 %v338, %v468
        %v470 = vpop.f32.mrf.mxu0
        %v471 = vadd.f32 %v338, %v470
        %472 = vmatprep.mubr.f32.mxu0 0.0
        %473 = vmatmul.mubr.f32.gmra.mxu0 %v376
        %v474 = vpop.f32.mrf.mxu0
        %v475 = vadd.f32 %v343, %v474
        %v476 = vpop.f32.mrf.mxu0
        %v477 = vadd.f32 %v343, %v476
        %478 = vmatprep.mubr.f32.mxu0 0.0
        %479 = vmatmul.mubr.f32.gmra.mxu0 %v379
        %v480 = vpop.f32.mrf.mxu0
        %v481 = vadd.f32 %v348, %v480
        %v482 = vpop.f32.mrf.mxu0
        %v483 = vadd.f32 %v348, %v482
        %484 = vmatprep.mubr.f32.mxu0 0.0
        %485 = vmatmul.mubr.f32.gmra.mxu0 %v382
        %v486 = vpop.f32.mrf.mxu0
        %v487 = vadd.f32 %v353, %v486
        %v488 = vpop.f32.mrf.mxu0
        %v489 = vadd.f32 %v353, %v488
        %490 = vmatprep.mubr.f32.mxu0 0.0
        %491 = vmatmul.mubr.f32.gmra.mxu0 %v385
        %v492 = vpop.f32.mrf.mxu0
        %v493 = vadd.f32 %v358, %v492
        %v494 = vpop.f32.mrf.mxu0
        %v495 = vadd.f32 %v358, %v494
        %496 = vmatprep.mubr.f32.mxu0 0.0
        %497 = vmatmul.mubr.f32.gmra.mxu0 %v388
        %v498 = vpop.f32.mrf.mxu0
        %v499 = vadd.f32 %v363, %v498
        %v500 = vpop.f32.mrf.mxu0
        %v501 = vadd.f32 %v363, %v500
        %502 = vdwg.mxu0
        %v503 = vmul.f32 %v457, 0.2
        %v504 = vmul.f32 %v459, 0.2
        %v505 = vmul.f32 %v463, 0.2
        %v506 = vmul.f32 %v465, 0.2
        %v507 = vmul.f32 %v469, 0.2
        %v508 = vmul.f32 %v471, 0.2
        %v509 = vmul.f32 %v475, 0.2
        %v510 = vmul.f32 %v477, 0.2
        %v511 = vmul.f32 %v481, 0.2
        %v512 = vmul.f32 %v483, 0.2
        %v513 = vmul.f32 %v487, 0.2
        %v514 = vmul.f32 %v489, 0.2
        %v515 = vmul.f32 %v493, 0.2
        %v516 = vmul.f32 %v495, 0.2
        %v517 = vmul.f32 %v499, 0.2
        %v518 = vmul.f32 %v501, 0.2
        %v519 = vmax.f32 %v457, %v503
        %v520 = vmax.f32 %v459, %v504
        %v521 = vmax.f32 %v463, %v505
        %v522 = vmax.f32 %v465, %v506
        %v523 = vmax.f32 %v469, %v507
        %v524 = vmax.f32 %v471, %v508
        %v525 = vmax.f32 %v475, %v509
        %v526 = vmax.f32 %v477, %v510
        %v527 = vmax.f32 %v481, %v511
        %v528 = vmax.f32 %v483, %v512
        %v529 = vmax.f32 %v487, %v513
        %v530 = vmax.f32 %v489, %v514
        %v531 = vmax.f32 %v493, %v515
        %v532 = vmax.f32 %v495, %v516
        %v533 = vmax.f32 %v499, %v517
        %v534 = vmax.f32 %v501, %v518
        %535 = vst [vmem:[%s218] sm:$0xff] %v519
        %536 = vst [vmem:[%s218 + $0x8] sm:$0xff] %v520
        %537 = vst [vmem:[%s218 + $0x10] sm:$0xff] %v521
        %538 = vst [vmem:[%s218 + $0x18] sm:$0xff] %v522
        %539 = vst [vmem:[%s218 + $0x20] sm:$0xff] %v523
        %540 = vst [vmem:[%s218 + $0x28] sm:$0xff] %v524
        %541 = vst [vmem:[%s218 + $0x30] sm:$0xff] %v525
        %542 = vst [vmem:[%s218 + $0x38] sm:$0xff] %v526
        %543 = vst [vmem:[%s218 + $0x40] sm:$0xff] %v527
        %544 = vst [vmem:[%s218 + $0x48] sm:$0xff] %v528
        %545 = vst [vmem:[%s218 + $0x50] sm:$0xff] %v529
        %546 = vst [vmem:[%s218 + $0x58] sm:$0xff] %v530
        %547 = vst [vmem:[%s218 + $0x60] sm:$0xff] %v531
        %548 = vst [vmem:[%s218 + $0x68] sm:$0xff] %v532
        %549 = vst [vmem:[%s218 + $0x70] sm:$0xff] %v533
        %550 = vst [vmem:[%s218 + $0x78] sm:$0xff] %v534
        %s551 = sand.u32 %s137, 1
        %s552 = scalar_lea.sflag [#allocation4], %s551
        %s553 = sand.u32 %s137, 1
        %s554 = smul.addr %s553, 128
        %s555 = scalar_lea.vmem [#allocation3], %s554
        // Predicated region
        $region41: #{tpu_custom_call.1} parent=39 // pred_check
          %p556 = pneg %p147
        $region42: #{tpu_custom_call.1} parent=39 // pred_check_branch
          %558 = sbr.rel (%p556) target = $region44
        $region43: #{tpu_custom_call.1} parent=39 // pred_region
          %s559 = smul.u32 2, %s19
          %s561 = ssub.s32 2048, 2048
          %562 = vsyncadd %s552, %s561
          %s563 = smul.addr %s559, 128
          %s564 = scalar_lea.hbm %s5, %s563
          %s565 = sshll.u32 %s555, 4
          %s566 = int_to_ptr.vmem [resolvable:$true] %s565
          %571 = dma.vmem_to_hbm [thread:$0]  %s566, 2048, %s564, %s552, 256, 512, 16
        $region44: #{tpu_custom_call.1} parent=39 // pred_fallthru
          _
      $region40: #{tpu_custom_call.1} parent=5 // pred_fallthru
        _
      %p572 = scmp.le.s32.totalorder 2, %s14
      // Predicated region
      $region45: #{tpu_custom_call.1} parent=5 // pred_check
        %p573 = pneg %p572
      $region46: #{tpu_custom_call.1} parent=5 // pred_check_branch
        %575 = sbr.rel (%p573) target = $region48
      $region47: #{tpu_custom_call.1} parent=5 // pred_region
        %s576 = ssub.s32 %s14, 2
        // Predicated region
        $region49: #{tpu_custom_call.1} parent=47 // pred_check
          %p577 = pneg %p153
        $region50: #{tpu_custom_call.1} parent=47 // pred_check_branch
          %579 = sbr.rel (%p577) target = $region52
        $region51: #{tpu_custom_call.1} parent=47 // pred_region
          %s580 = sand.u32 %s138, 1
          %s581 = scalar_lea.sflag [#allocation4], %s580
          %s582 = sand.u32 %s138, 1
          %s583 = smul.addr %s582, 128
          %s584 = scalar_lea.vmem [#allocation3], %s583
          %585 = dma.done %s581, 2048
        $region52: #{tpu_custom_call.1} parent=47 // pred_fallthru
          _
      $region48: #{tpu_custom_call.1} parent=5 // pred_fallthru
        _
    $region6: #{tpu_custom_call.1} parent=1 // loop_footer
      %s18 = sadd.s32 1, %s14
    $region7: #{tpu_custom_call.1} parent=1 // loop_footer_branch
      %13 = sbr.rel target = $region3
    $region8: #{tpu_custom_call.1} parent=1 // loop_exit
      _
    %586 = vsyncpa [#allocation4], 1
    %s587 = scalar_lea.sflag [#allocation4], 1
    %588 = vsyncpa %s587, 1

</llo_original>
